<compile_context>
chip_gen: v6e
topology: v6e:2x2x1
jax: 0.10.0
libtpu: 0.0.40
codegen_flags: <defaults>
</compile_context>

<pallas_src>
import functools

import jax
import jax.numpy as jnp
import numpy as np
from jax.experimental import pallas as pl
from jax.experimental.pallas import tpu as pltpu


def _tap_deltas(ksize, dilation, W):
    """(tap_index, flat lane shift) for every kernel tap."""
    pad = ((ksize - 1) // 2) * dilation
    taps = []
    for ky in range(ksize):
        for kx in range(ksize):
            dy = ky * dilation - pad
            dx = kx * dilation - pad
            taps.append((ky * ksize + kx, dy * W + dx))
    return taps


def _tap_validity_mask(H, W, ksize, dilation):
    """(K*K, H*W) float32 mask: 1 where the dilated tap lands inside the image."""
    pad = ((ksize - 1) // 2) * dilation
    ys, xs = np.meshgrid(np.arange(H), np.arange(W), indexing="ij")
    ys = ys.reshape(-1)
    xs = xs.reshape(-1)
    rows = []
    for ky in range(ksize):
        for kx in range(ksize):
            dy = ky * dilation - pad
            dx = kx * dilation - pad
            valid = ((ys + dy >= 0) & (ys + dy < H) & (xs + dx >= 0) & (xs + dx < W))
            rows.append(valid.astype(np.float32))
    return np.stack(rows, axis=0)


def _ibr_dilated_kernel(x_ref, w_red_ref, w_init_ref, w_span_ref, mask_ref,
                        t2_ref, alpha_ref, o_ref, xbuf_ref, *,
                        ksize, dilation, H, W, off, nb):
    """Processes `nb` batch elements per grid step in (channels, pixels) layout.

    x_ref:      (nb, Cin, HW)       raw flattened image(s)
    w_red_ref:  (Cout, Cin+1)       BN1 scale+shift folded (last col = shift)
    w_init_ref: (Cout, Cin+1)       BN2 scale folded (last col = 0)
    w_span_ref: (KK, Cout)
    mask_ref:   (KK, HW)            precomputed tap-validity mask
    t2_ref:     (Cout, 1)           BN2 shift
    alpha_ref:  (Cout, 1)           PReLU slope
    o_ref:      (nb, Cout, HW)
    xbuf_ref:   (Cin+1, HW+2*off)   VMEM scratch: zero halo + ones row (bias fold)
    """
    hw = H * W
    cin_aug = xbuf_ref.shape[0]                       # Cin + 1

    # One-time per invocation: zero the halos, write the ones row (BN1 bias fold).
    if off > 0:
        xbuf_ref[:, pl.ds(0, off)] = jnp.zeros((cin_aug, off), jnp.float32)
        xbuf_ref[:, pl.ds(off + hw, off)] = jnp.zeros((cin_aug, off), jnp.float32)
    xbuf_ref[cin_aug - 1:cin_aug, pl.ds(off, hw)] = jnp.ones((1, hw), jnp.float32)

    w_red = w_red_ref[...]
    w_init = w_init_ref[...]
    w_span = w_span_ref[...]
    mask = mask_ref[...]
    t2 = t2_ref[...]
    alpha = alpha_ref[...]

    taps = _tap_deltas(ksize, dilation, W)
    center = (ksize // 2) * ksize + (ksize // 2)

    for b in range(nb):                               # static, unrolled
        xc = x_ref[b]                                 # (Cin, HW)
        xbuf_ref[0:cin_aug - 1, pl.ds(off, hw)] = xc
        xc_aug = xbuf_ref[:, pl.ds(off, hw)]          # (Cin+1, HW), last row == 1

        # Involution kernel generation: (scaled+biased) reduce 1x1 on MXU -> ReLU -> span 1x1.
        r = jnp.dot(w_red, xc_aug, preferred_element_type=jnp.float32)       # (Cout, HW)
        r = jnp.maximum(r, 0.0)
        ker = jnp.dot(w_span, r, preferred_element_type=jnp.float32) * mask  # (KK, HW)

        # Weighted sum of the K*K dilated neighborhoods (VPU); center tap reuses xc_aug.
        weighted = ker[center:center + 1, :] * xc_aug                        # (Cin+1, HW)
        for kidx, delta in taps:
            if kidx == center:
                continue
            patch = xbuf_ref[:, pl.ds(off + delta, hw)]                      # shifted view
            weighted = weighted + ker[kidx:kidx + 1, :] * patch

        # Single initial-mapping matmul (BN2 scale folded), then shift + PReLU.
        out = jnp.dot(w_init, weighted, preferred_element_type=jnp.float32)  # (Cout, HW)
        y = out + t2
        y = jnp.where(y >= 0.0, y, alpha * y)
        o_ref[b] = y.astype(o_ref.dtype)


def _tensorcores_per_chip():
    """v7x exposes 2 TensorCores per device; v5e/v6e have 1. Default to 1."""
    try:
        kind = jax.devices()[0].device_kind.lower()
    except Exception:
        return 1
    return 2 if ("v7" in kind or "7x" in kind) else 1


def ibr_dilated_forward(x_nchw, params, *, ksize, dilation):
    """Wrapper: NCHW in, NCHW out (PyTorch convention). stride == 1 only."""
    B, Cin, H, W = x_nchw.shape
    Cout = params["w_init"].shape[1]
    kk = ksize * ksize
    hw = H * W
    pad = ((ksize - 1) // 2) * dilation
    # Halo (in lanes) of the flattened row: >= max |flat shift|, rounded up to 128
    # so the center slice stays vreg-aligned.
    off = (-(-(pad * W + pad) // 128) * 128) if pad > 0 else 0
    assert off >= pad * W + pad, "halo too small for the flat-shift scheme"
    hwe = hw + 2 * off

    # Batch per grid step: fuse the whole batch on single-TC chips (per-step
    # overhead dominates at this size); keep a 'parallel' batch axis on v7x.
    nb = 1 if (_tensorcores_per_chip() > 1 and B > 1) else B
    steps = B // nb

    x_flat = x_nchw.reshape(B, Cin, hw).astype(jnp.float32)   # metadata-only reshape

    s1, t1 = params["bn1"][0], params["bn1"][1]
    s2, t2 = params["bn2"][0], params["bn2"][1]
    alpha = params["alpha"][0]

    # BN1 folded entirely into the reduce matmul (scale on rows, shift via the
    # scratch ones row); BN2 scale folded into the initial-mapping matmul.
    w_red_aug = jnp.concatenate(
        [params["w_red"].T * s1[:, None], t1[:, None]], axis=1).astype(jnp.float32)      # (Cout, Cin+1)
    w_init_aug = jnp.concatenate(
        [params["w_init"].T * s2[:, None], jnp.zeros((Cout, 1), jnp.float32)],
        axis=1).astype(jnp.float32)                                                      # (Cout, Cin+1)
    w_span_t = params["w_span"].T.astype(jnp.float32)                                    # (KK, Cout)
    mask = jnp.asarray(_tap_validity_mask(H, W, ksize, dilation))                        # (KK, HW)
    t2_col = t2.reshape(Cout, 1).astype(jnp.float32)
    alpha_col = alpha.reshape(Cout, 1).astype(jnp.float32)

    kernel = functools.partial(_ibr_dilated_kernel, ksize=ksize, dilation=dilation,
                               H=H, W=W, off=off, nb=nb)

    out = pl.pallas_call(
        kernel,
        out_shape=jax.ShapeDtypeStruct((B, Cout, hw), jnp.float32),
        grid=(steps,),
        in_specs=[
            pl.BlockSpec((nb, Cin, hw), lambda i: (i, 0, 0)),
            pl.BlockSpec((Cout, Cin + 1), lambda i: (0, 0)),
            pl.BlockSpec((Cout, Cin + 1), lambda i: (0, 0)),
            pl.BlockSpec((kk, Cout), lambda i: (0, 0)),
            pl.BlockSpec((kk, hw), lambda i: (0, 0)),
            pl.BlockSpec((Cout, 1), lambda i: (0, 0)),
            pl.BlockSpec((Cout, 1), lambda i: (0, 0)),
        ],
        out_specs=pl.BlockSpec((nb, Cout, hw), lambda i: (i, 0, 0)),
        scratch_shapes=[pltpu.VMEM((Cin + 1, hwe), jnp.float32)],
        compiler_params=pltpu.CompilerParams(
            dimension_semantics=("parallel",) if steps > 1 else ("arbitrary",)),
    )(x_flat, w_red_aug, w_init_aug, w_span_t, mask, t2_col, alpha_col)

    return out.reshape(B, Cout, H, W)                                                    # already NCHW


def make_params(key, n_in, n_out, ksize, *, bn1_eps=1e-5, bn2_eps=1e-3):
    """Deterministic synthetic parameters (shapes from IBRDilated.__init__)."""
    kk = ksize * ksize
    ks = jax.random.split(key, 12)
    w_init = 0.2 * jax.random.normal(ks[0], (n_in, n_out), jnp.float32)   # initial_mapping 1x1
    w_red = 0.2 * jax.random.normal(ks[1], (n_in, n_out), jnp.float32)    # reduce_mapping 1x1
    w_span = 0.2 * jax.random.normal(ks[2], (n_out, kk), jnp.float32)     # span_mapping 1x1

    def bn_pack(kg, kb, km, kv, eps):
        gamma = jax.random.uniform(kg, (n_out,), jnp.float32, 0.8, 1.2)
        beta = 0.1 * jax.random.normal(kb, (n_out,), jnp.float32)
        mean = 0.1 * jax.random.normal(km, (n_out,), jnp.float32)
        var = jax.random.uniform(kv, (n_out,), jnp.float32, 0.5, 1.5)
        scale = gamma * jax.lax.rsqrt(var + eps)
        shift = beta - mean * scale
        return jnp.stack([scale, shift], axis=0)                          # (2, n_out)

    bn1 = bn_pack(ks[3], ks[4], ks[5], ks[6], bn1_eps)   # sigma_mapping BN (eps=1e-5)
    bn2 = bn_pack(ks[7], ks[8], ks[9], ks[10], bn2_eps)  # outer BatchNorm2d (eps=1e-3)
    alpha = (0.25 + 0.05 * jax.random.normal(ks[11], (n_out,), jnp.float32)).reshape(1, n_out)
    return {"w_init": w_init, "w_red": w_red, "w_span": w_span,
            "bn1": bn1, "bn2": bn2, "alpha": alpha}


def reference_forward(x_nchw, params, *, ksize, dilation):
    """Pure-JAX reference of the same math (for correctness checking)."""
    B, Cin, H, W = x_nchw.shape
    Cout = params["w_init"].shape[1]
    pad = ((ksize - 1) // 2) * dilation
    x_nhwc = jnp.transpose(x_nchw, (0, 2, 3, 1)).astype(jnp.float32)
    xpad = jnp.pad(x_nhwc, ((0, 0), (pad, pad), (pad, pad), (0, 0)))
    x_init = jnp.einsum("bhwc,cd->bhwd", xpad, params["w_init"])
    r = jnp.einsum("bhwc,cd->bhwd", x_nhwc, params["w_red"])
    r = jnp.maximum(r * params["bn1"][0] + params["bn1"][1], 0.0)
    ker = jnp.einsum("bhwc,ck->bhwk", r, params["w_span"])
    out = jnp.zeros((B, H, W, Cout), jnp.float32)
    for ky in range(ksize):
        for kx in range(ksize):
            kidx = ky * ksize + kx
            patch = x_init[:, ky * dilation:ky * dilation + H,
                           kx * dilation:kx * dilation + W, :]
            out = out + ker[..., kidx:kidx + 1] * patch
    y = out * params["bn2"][0] + params["bn2"][1]
    y = jnp.where(y >= 0.0, y, params["alpha"][0] * y)
    return jnp.transpose(y, (0, 3, 1, 2))


if __name__ == "__main__":
    # Config: nIn=4, nOut=8, kSize=3, stride=1, d=2 -> padding = 2, output spatial = input spatial.
    B, Cin, H, W = 2, 4, 16, 16
    Cout, ksize, dil = 8, 3, 2

    key = jax.random.PRNGKey(0)
    kx, kp = jax.random.split(key)
    x = jax.random.normal(kx, (B, Cin, H, W), jnp.float32)
    params = make_params(kp, Cin, Cout, ksize)

    fwd = jax.jit(functools.partial(ibr_dilated_forward, ksize=ksize, dilation=dil))
    y = jax.block_until_ready(fwd(x, params))
    assert y.shape == (B, Cout, H, W), y.shape

    y_ref = reference_forward(x, params, ksize=ksize, dilation=dil)
    np.testing.assert_allclose(np.asarray(y), np.asarray(y_ref), rtol=1e-4, atol=1e-4)

    print("KERNEL_OK")
</pallas_src>

<mosaic_0001>
module attributes {stable_mosaic.version = 11 : i64} {
  func.func @_ibr_dilated_kernel(%arg0: i32, %arg1: memref<2x4x256xf32, #tpu.memory_space<vmem>>, %arg2: memref<8x5xf32, #tpu.memory_space<vmem>>, %arg3: memref<8x5xf32, #tpu.memory_space<vmem>>, %arg4: memref<9x8xf32, #tpu.memory_space<vmem>>, %arg5: memref<9x256xf32, #tpu.memory_space<vmem>>, %arg6: memref<8x1xf32, #tpu.memory_space<vmem>>, %arg7: memref<8x1xf32, #tpu.memory_space<vmem>>, %arg8: memref<2x8x256xf32, #tpu.memory_space<vmem>>, %arg9: memref<5x512xf32, #tpu.memory_space<vmem>>) attributes {dimension_semantics = [#tpu.dimension_semantics<arbitrary>], iteration_bounds = array<i64: 1>, scalar_prefetch = 0 : i64, scratch_operands = 1 : i64, tpu.core_type = #tpu.core_type<tc>, window_params = [{transform_indices = @transform_0, window_bounds = array<i64: 2, 4, 256>}, {pipeline_mode = #tpu.pipeline_mode<synchronous>, transform_indices = @transform_1, window_bounds = array<i64: 8, 5>}, {pipeline_mode = #tpu.pipeline_mode<synchronous>, transform_indices = @transform_2, window_bounds = array<i64: 8, 5>}, {pipeline_mode = #tpu.pipeline_mode<synchronous>, transform_indices = @transform_3, window_bounds = array<i64: 9, 8>}, {pipeline_mode = #tpu.pipeline_mode<synchronous>, transform_indices = @transform_4, window_bounds = array<i64: 9, 256>}, {pipeline_mode = #tpu.pipeline_mode<synchronous>, transform_indices = @transform_5, window_bounds = array<i64: 8, 1>}, {pipeline_mode = #tpu.pipeline_mode<synchronous>, transform_indices = @transform_6, window_bounds = array<i64: 8, 1>}, {transform_indices = @transform_7, window_bounds = array<i64: 2, 8, 256>}]} {
    %cst = arith.constant 0.000000e+00 : f32
    %0 = vector.broadcast %cst : f32 to vector<5x128xf32>
    %c0 = arith.constant 0 : index
    %c0_0 = arith.constant 0 : index
    %1 = vector.load %arg9[%c0, %c0_0] : memref<5x512xf32, #tpu.memory_space<vmem>>, vector<5x128xf32>
    tpu.vector_store %arg9[%c0, %c0_0], %0 {strides = array<i32>} : memref<5x512xf32, #tpu.memory_space<vmem>>, vector<5x128xf32>,
    %cst_1 = arith.constant 0.000000e+00 : f32
    %2 = vector.broadcast %cst_1 : f32 to vector<5x128xf32>
    %c0_2 = arith.constant 0 : index
    %c384 = arith.constant 384 : index
    %3 = vector.load %arg9[%c0_2, %c384] : memref<5x512xf32, #tpu.memory_space<vmem>>, vector<5x128xf32>
    tpu.vector_store %arg9[%c0_2, %c384], %2 {strides = array<i32>} : memref<5x512xf32, #tpu.memory_space<vmem>>, vector<5x128xf32>,
    %cst_3 = arith.constant 1.000000e+00 : f32
    %4 = vector.broadcast %cst_3 : f32 to vector<1x256xf32>
    %c4 = arith.constant 4 : index
    %c128 = arith.constant 128 : index
    %5 = vector.load %arg9[%c4, %c128] : memref<5x512xf32, #tpu.memory_space<vmem>>, vector<1x256xf32>
    tpu.vector_store %arg9[%c4, %c128], %4 {strides = array<i32>} : memref<5x512xf32, #tpu.memory_space<vmem>>, vector<1x256xf32>,
    %c0_4 = arith.constant 0 : index
    %c0_5 = arith.constant 0 : index
    %6 = vector.load %arg2[%c0_4, %c0_5] : memref<8x5xf32, #tpu.memory_space<vmem>>, vector<8x5xf32>
    %c0_6 = arith.constant 0 : index
    %c0_7 = arith.constant 0 : index
    %7 = vector.load %arg3[%c0_6, %c0_7] : memref<8x5xf32, #tpu.memory_space<vmem>>, vector<8x5xf32>
    %c0_8 = arith.constant 0 : index
    %c0_9 = arith.constant 0 : index
    %8 = vector.load %arg4[%c0_8, %c0_9] : memref<9x8xf32, #tpu.memory_space<vmem>>, vector<9x8xf32>
    %c0_10 = arith.constant 0 : index
    %c0_11 = arith.constant 0 : index
    %9 = vector.load %arg5[%c0_10, %c0_11] : memref<9x256xf32, #tpu.memory_space<vmem>>, vector<9x256xf32>
    %c0_12 = arith.constant 0 : index
    %c0_13 = arith.constant 0 : index
    %10 = vector.load %arg6[%c0_12, %c0_13] : memref<8x1xf32, #tpu.memory_space<vmem>>, vector<8x1xf32>
    %c0_14 = arith.constant 0 : index
    %c0_15 = arith.constant 0 : index
    %11 = vector.load %arg7[%c0_14, %c0_15] : memref<8x1xf32, #tpu.memory_space<vmem>>, vector<8x1xf32>
    %c0_16 = arith.constant 0 : index
    %c0_17 = arith.constant 0 : index
    %c0_18 = arith.constant 0 : index
    %12 = vector.load %arg1[%c0_16, %c0_17, %c0_18] : memref<2x4x256xf32, #tpu.memory_space<vmem>>, vector<1x4x256xf32>
    %13 = vector.shape_cast %12 : vector<1x4x256xf32> to vector<4x256xf32>
    %c0_19 = arith.constant 0 : index
    %c128_20 = arith.constant 128 : index
    %14 = vector.load %arg9[%c0_19, %c128_20] : memref<5x512xf32, #tpu.memory_space<vmem>>, vector<4x256xf32>
    tpu.vector_store %arg9[%c0_19, %c128_20], %13 {strides = array<i32>} : memref<5x512xf32, #tpu.memory_space<vmem>>, vector<4x256xf32>,
    %c0_21 = arith.constant 0 : index
    %c128_22 = arith.constant 128 : index
    %15 = vector.load %arg9[%c0_21, %c128_22] : memref<5x512xf32, #tpu.memory_space<vmem>>, vector<5x256xf32>
    %cst_23 = arith.constant dense<0.000000e+00> : vector<8x256xf32>
    %16 = tpu.matmul %6, %15, %cst_23 {dimension_numbers = #tpu.dot_dimension_numbers<[1], [0], [0], [1], [0, 0, 1, 1], [], []>} : vector<8x5xf32>, vector<5x256xf32>, vector<8x256xf32> -> vector<8x256xf32>
    %cst_24 = arith.constant 0.000000e+00 : f32
    %17 = vector.broadcast %cst_24 : f32 to vector<8x256xf32>
    %18 = arith.maximumf %16, %17 : vector<8x256xf32>
    %cst_25 = arith.constant dense<0.000000e+00> : vector<9x256xf32>
    %19 = tpu.matmul %8, %18, %cst_25 {dimension_numbers = #tpu.dot_dimension_numbers<[1], [0], [0], [1], [0, 0, 1, 1], [], []>} : vector<9x8xf32>, vector<8x256xf32>, vector<9x256xf32> -> vector<9x256xf32>
    %20 = arith.mulf %19, %9 : vector<9x256xf32>
    %21 = vector.extract_strided_slice %20 {offsets = [4, 0], sizes = [1, 256], strides = [1, 1]} : vector<9x256xf32> to vector<1x256xf32>
    %22 = vector.broadcast %21 : vector<1x256xf32> to vector<5x256xf32>
    %23 = arith.mulf %22, %15 : vector<5x256xf32>
    %c0_26 = arith.constant 0 : index
    %c94 = arith.constant 94 : index
    %24 = vector.load %arg9[%c0_26, %c94] : memref<5x512xf32, #tpu.memory_space<vmem>>, vector<5x256xf32>
    %25 = vector.extract_strided_slice %20 {offsets = [0, 0], sizes = [1, 256], strides = [1, 1]} : vector<9x256xf32> to vector<1x256xf32>
    %26 = vector.broadcast %25 : vector<1x256xf32> to vector<5x256xf32>
    %27 = arith.mulf %26, %24 : vector<5x256xf32>
    %28 = arith.addf %23, %27 : vector<5x256xf32>
    %c0_27 = arith.constant 0 : index
    %c96 = arith.constant 96 : index
    %29 = vector.load %arg9[%c0_27, %c96] : memref<5x512xf32, #tpu.memory_space<vmem>>, vector<5x256xf32>
    %30 = vector.extract_strided_slice %20 {offsets = [1, 0], sizes = [1, 256], strides = [1, 1]} : vector<9x256xf32> to vector<1x256xf32>
    %31 = vector.broadcast %30 : vector<1x256xf32> to vector<5x256xf32>
    %32 = arith.mulf %31, %29 : vector<5x256xf32>
    %33 = arith.addf %28, %32 : vector<5x256xf32>
    %c0_28 = arith.constant 0 : index
    %c98 = arith.constant 98 : index
    %34 = vector.load %arg9[%c0_28, %c98] : memref<5x512xf32, #tpu.memory_space<vmem>>, vector<5x256xf32>
    %35 = vector.extract_strided_slice %20 {offsets = [2, 0], sizes = [1, 256], strides = [1, 1]} : vector<9x256xf32> to vector<1x256xf32>
    %36 = vector.broadcast %35 : vector<1x256xf32> to vector<5x256xf32>
    %37 = arith.mulf %36, %34 : vector<5x256xf32>
    %38 = arith.addf %33, %37 : vector<5x256xf32>
    %c0_29 = arith.constant 0 : index
    %c126 = arith.constant 126 : index
    %39 = vector.load %arg9[%c0_29, %c126] : memref<5x512xf32, #tpu.memory_space<vmem>>, vector<5x256xf32>
    %40 = vector.extract_strided_slice %20 {offsets = [3, 0], sizes = [1, 256], strides = [1, 1]} : vector<9x256xf32> to vector<1x256xf32>
    %41 = vector.broadcast %40 : vector<1x256xf32> to vector<5x256xf32>
    %42 = arith.mulf %41, %39 : vector<5x256xf32>
    %43 = arith.addf %38, %42 : vector<5x256xf32>
    %c0_30 = arith.constant 0 : index
    %c130 = arith.constant 130 : index
    %44 = vector.load %arg9[%c0_30, %c130] : memref<5x512xf32, #tpu.memory_space<vmem>>, vector<5x256xf32>
    %45 = vector.extract_strided_slice %20 {offsets = [5, 0], sizes = [1, 256], strides = [1, 1]} : vector<9x256xf32> to vector<1x256xf32>
    %46 = vector.broadcast %45 : vector<1x256xf32> to vector<5x256xf32>
    %47 = arith.mulf %46, %44 : vector<5x256xf32>
    %48 = arith.addf %43, %47 : vector<5x256xf32>
    %c0_31 = arith.constant 0 : index
    %c158 = arith.constant 158 : index
    %49 = vector.load %arg9[%c0_31, %c158] : memref<5x512xf32, #tpu.memory_space<vmem>>, vector<5x256xf32>
    %50 = vector.extract_strided_slice %20 {offsets = [6, 0], sizes = [1, 256], strides = [1, 1]} : vector<9x256xf32> to vector<1x256xf32>
    %51 = vector.broadcast %50 : vector<1x256xf32> to vector<5x256xf32>
    %52 = arith.mulf %51, %49 : vector<5x256xf32>
    %53 = arith.addf %48, %52 : vector<5x256xf32>
    %c0_32 = arith.constant 0 : index
    %c160 = arith.constant 160 : index
    %54 = vector.load %arg9[%c0_32, %c160] : memref<5x512xf32, #tpu.memory_space<vmem>>, vector<5x256xf32>
    %55 = vector.extract_strided_slice %20 {offsets = [7, 0], sizes = [1, 256], strides = [1, 1]} : vector<9x256xf32> to vector<1x256xf32>
    %56 = vector.broadcast %55 : vector<1x256xf32> to vector<5x256xf32>
    %57 = arith.mulf %56, %54 : vector<5x256xf32>
    %58 = arith.addf %53, %57 : vector<5x256xf32>
    %c0_33 = arith.constant 0 : index
    %c162 = arith.constant 162 : index
    %59 = vector.load %arg9[%c0_33, %c162] : memref<5x512xf32, #tpu.memory_space<vmem>>, vector<5x256xf32>
    %60 = vector.extract_strided_slice %20 {offsets = [8, 0], sizes = [1, 256], strides = [1, 1]} : vector<9x256xf32> to vector<1x256xf32>
    %61 = vector.broadcast %60 : vector<1x256xf32> to vector<5x256xf32>
    %62 = arith.mulf %61, %59 : vector<5x256xf32>
    %63 = arith.addf %58, %62 : vector<5x256xf32>
    %cst_34 = arith.constant dense<0.000000e+00> : vector<8x256xf32>
    %64 = tpu.matmul %7, %63, %cst_34 {dimension_numbers = #tpu.dot_dimension_numbers<[1], [0], [0], [1], [0, 0, 1, 1], [], []>} : vector<8x5xf32>, vector<5x256xf32>, vector<8x256xf32> -> vector<8x256xf32>
    %65 = vector.broadcast %10 : vector<8x1xf32> to vector<8x256xf32>
    %66 = arith.addf %64, %65 : vector<8x256xf32>
    %cst_35 = arith.constant 0.000000e+00 : f32
    %67 = vector.broadcast %cst_35 : f32 to vector<8x256xf32>
    %68 = arith.cmpf oge, %66, %67 : vector<8x256xf32>
    %69 = vector.broadcast %11 : vector<8x1xf32> to vector<8x256xf32>
    %70 = arith.mulf %69, %66 : vector<8x256xf32>
    %71 = arith.select %68, %66, %70 : vector<8x256xi1>, vector<8x256xf32>
    %c0_36 = arith.constant 0 : index
    %c0_37 = arith.constant 0 : index
    %c0_38 = arith.constant 0 : index
    %72 = vector.load %arg8[%c0_36, %c0_37, %c0_38] : memref<2x8x256xf32, #tpu.memory_space<vmem>>, vector<1x8x256xf32>
    %73 = vector.shape_cast %72 : vector<1x8x256xf32> to vector<8x256xf32>
    %74 = vector.shape_cast %71 : vector<8x256xf32> to vector<1x8x256xf32>
    tpu.vector_store %arg8[%c0_36, %c0_37, %c0_38], %74 {strides = array<i32>} : memref<2x8x256xf32, #tpu.memory_space<vmem>>, vector<1x8x256xf32>,
    %c1 = arith.constant 1 : index
    %c0_39 = arith.constant 0 : index
    %c0_40 = arith.constant 0 : index
    %75 = vector.load %arg1[%c1, %c0_39, %c0_40] : memref<2x4x256xf32, #tpu.memory_space<vmem>>, vector<1x4x256xf32>
    %76 = vector.shape_cast %75 : vector<1x4x256xf32> to vector<4x256xf32>
    %c0_41 = arith.constant 0 : index
    %c128_42 = arith.constant 128 : index
    %77 = vector.load %arg9[%c0_41, %c128_42] : memref<5x512xf32, #tpu.memory_space<vmem>>, vector<4x256xf32>
    tpu.vector_store %arg9[%c0_41, %c128_42], %76 {strides = array<i32>} : memref<5x512xf32, #tpu.memory_space<vmem>>, vector<4x256xf32>,
    %c0_43 = arith.constant 0 : index
    %c128_44 = arith.constant 128 : index
    %78 = vector.load %arg9[%c0_43, %c128_44] : memref<5x512xf32, #tpu.memory_space<vmem>>, vector<5x256xf32>
    %cst_45 = arith.constant dense<0.000000e+00> : vector<8x256xf32>
    %79 = tpu.matmul %6, %78, %cst_45 {dimension_numbers = #tpu.dot_dimension_numbers<[1], [0], [0], [1], [0, 0, 1, 1], [], []>} : vector<8x5xf32>, vector<5x256xf32>, vector<8x256xf32> -> vector<8x256xf32>
    %cst_46 = arith.constant 0.000000e+00 : f32
    %80 = vector.broadcast %cst_46 : f32 to vector<8x256xf32>
    %81 = arith.maximumf %79, %80 : vector<8x256xf32>
    %cst_47 = arith.constant dense<0.000000e+00> : vector<9x256xf32>
    %82 = tpu.matmul %8, %81, %cst_47 {dimension_numbers = #tpu.dot_dimension_numbers<[1], [0], [0], [1], [0, 0, 1, 1], [], []>} : vector<9x8xf32>, vector<8x256xf32>, vector<9x256xf32> -> vector<9x256xf32>
    %83 = arith.mulf %82, %9 : vector<9x256xf32>
    %84 = vector.extract_strided_slice %83 {offsets = [4, 0], sizes = [1, 256], strides = [1, 1]} : vector<9x256xf32> to vector<1x256xf32>
    %85 = vector.broadcast %84 : vector<1x256xf32> to vector<5x256xf32>
    %86 = arith.mulf %85, %78 : vector<5x256xf32>
    %c0_48 = arith.constant 0 : index
    %c94_49 = arith.constant 94 : index
    %87 = vector.load %arg9[%c0_48, %c94_49] : memref<5x512xf32, #tpu.memory_space<vmem>>, vector<5x256xf32>
    %88 = vector.extract_strided_slice %83 {offsets = [0, 0], sizes = [1, 256], strides = [1, 1]} : vector<9x256xf32> to vector<1x256xf32>
    %89 = vector.broadcast %88 : vector<1x256xf32> to vector<5x256xf32>
    %90 = arith.mulf %89, %87 : vector<5x256xf32>
    %91 = arith.addf %86, %90 : vector<5x256xf32>
    %c0_50 = arith.constant 0 : index
    %c96_51 = arith.constant 96 : index
    %92 = vector.load %arg9[%c0_50, %c96_51] : memref<5x512xf32, #tpu.memory_space<vmem>>, vector<5x256xf32>
    %93 = vector.extract_strided_slice %83 {offsets = [1, 0], sizes = [1, 256], strides = [1, 1]} : vector<9x256xf32> to vector<1x256xf32>
    %94 = vector.broadcast %93 : vector<1x256xf32> to vector<5x256xf32>
    %95 = arith.mulf %94, %92 : vector<5x256xf32>
    %96 = arith.addf %91, %95 : vector<5x256xf32>
    %c0_52 = arith.constant 0 : index
    %c98_53 = arith.constant 98 : index
    %97 = vector.load %arg9[%c0_52, %c98_53] : memref<5x512xf32, #tpu.memory_space<vmem>>, vector<5x256xf32>
    %98 = vector.extract_strided_slice %83 {offsets = [2, 0], sizes = [1, 256], strides = [1, 1]} : vector<9x256xf32> to vector<1x256xf32>
    %99 = vector.broadcast %98 : vector<1x256xf32> to vector<5x256xf32>
    %100 = arith.mulf %99, %97 : vector<5x256xf32>
    %101 = arith.addf %96, %100 : vector<5x256xf32>
    %c0_54 = arith.constant 0 : index
    %c126_55 = arith.constant 126 : index
    %102 = vector.load %arg9[%c0_54, %c126_55] : memref<5x512xf32, #tpu.memory_space<vmem>>, vector<5x256xf32>
    %103 = vector.extract_strided_slice %83 {offsets = [3, 0], sizes = [1, 256], strides = [1, 1]} : vector<9x256xf32> to vector<1x256xf32>
    %104 = vector.broadcast %103 : vector<1x256xf32> to vector<5x256xf32>
    %105 = arith.mulf %104, %102 : vector<5x256xf32>
    %106 = arith.addf %101, %105 : vector<5x256xf32>
    %c0_56 = arith.constant 0 : index
    %c130_57 = arith.constant 130 : index
    %107 = vector.load %arg9[%c0_56, %c130_57] : memref<5x512xf32, #tpu.memory_space<vmem>>, vector<5x256xf32>
    %108 = vector.extract_strided_slice %83 {offsets = [5, 0], sizes = [1, 256], strides = [1, 1]} : vector<9x256xf32> to vector<1x256xf32>
    %109 = vector.broadcast %108 : vector<1x256xf32> to vector<5x256xf32>
    %110 = arith.mulf %109, %107 : vector<5x256xf32>
    %111 = arith.addf %106, %110 : vector<5x256xf32>
    %c0_58 = arith.constant 0 : index
    %c158_59 = arith.constant 158 : index
    %112 = vector.load %arg9[%c0_58, %c158_59] : memref<5x512xf32, #tpu.memory_space<vmem>>, vector<5x256xf32>
    %113 = vector.extract_strided_slice %83 {offsets = [6, 0], sizes = [1, 256], strides = [1, 1]} : vector<9x256xf32> to vector<1x256xf32>
    %114 = vector.broadcast %113 : vector<1x256xf32> to vector<5x256xf32>
    %115 = arith.mulf %114, %112 : vector<5x256xf32>
    %116 = arith.addf %111, %115 : vector<5x256xf32>
    %c0_60 = arith.constant 0 : index
    %c160_61 = arith.constant 160 : index
    %117 = vector.load %arg9[%c0_60, %c160_61] : memref<5x512xf32, #tpu.memory_space<vmem>>, vector<5x256xf32>
    %118 = vector.extract_strided_slice %83 {offsets = [7, 0], sizes = [1, 256], strides = [1, 1]} : vector<9x256xf32> to vector<1x256xf32>
    %119 = vector.broadcast %118 : vector<1x256xf32> to vector<5x256xf32>
    %120 = arith.mulf %119, %117 : vector<5x256xf32>
    %121 = arith.addf %116, %120 : vector<5x256xf32>
    %c0_62 = arith.constant 0 : index
    %c162_63 = arith.constant 162 : index
    %122 = vector.load %arg9[%c0_62, %c162_63] : memref<5x512xf32, #tpu.memory_space<vmem>>, vector<5x256xf32>
    %123 = vector.extract_strided_slice %83 {offsets = [8, 0], sizes = [1, 256], strides = [1, 1]} : vector<9x256xf32> to vector<1x256xf32>
    %124 = vector.broadcast %123 : vector<1x256xf32> to vector<5x256xf32>
    %125 = arith.mulf %124, %122 : vector<5x256xf32>
    %126 = arith.addf %121, %125 : vector<5x256xf32>
    %cst_64 = arith.constant dense<0.000000e+00> : vector<8x256xf32>
    %127 = tpu.matmul %7, %126, %cst_64 {dimension_numbers = #tpu.dot_dimension_numbers<[1], [0], [0], [1], [0, 0, 1, 1], [], []>} : vector<8x5xf32>, vector<5x256xf32>, vector<8x256xf32> -> vector<8x256xf32>
    %128 = vector.broadcast %10 : vector<8x1xf32> to vector<8x256xf32>
    %129 = arith.addf %127, %128 : vector<8x256xf32>
    %cst_65 = arith.constant 0.000000e+00 : f32
    %130 = vector.broadcast %cst_65 : f32 to vector<8x256xf32>
    %131 = arith.cmpf oge, %129, %130 : vector<8x256xf32>
    %132 = vector.broadcast %11 : vector<8x1xf32> to vector<8x256xf32>
    %133 = arith.mulf %132, %129 : vector<8x256xf32>
    %134 = arith.select %131, %129, %133 : vector<8x256xi1>, vector<8x256xf32>
    %c1_66 = arith.constant 1 : index
    %c0_67 = arith.constant 0 : index
    %c0_68 = arith.constant 0 : index
    %135 = vector.load %arg8[%c1_66, %c0_67, %c0_68] : memref<2x8x256xf32, #tpu.memory_space<vmem>>, vector<1x8x256xf32>
    %136 = vector.shape_cast %135 : vector<1x8x256xf32> to vector<8x256xf32>
    %137 = vector.shape_cast %134 : vector<8x256xf32> to vector<1x8x256xf32>
    tpu.vector_store %arg8[%c1_66, %c0_67, %c0_68], %137 {strides = array<i32>} : memref<2x8x256xf32, #tpu.memory_space<vmem>>, vector<1x8x256xf32>,
    return
  }
  func.func @transform_0(%arg0: i32) -> (i32, i32, i32) {
    %c0_i32 = arith.constant 0 : i32
    %c0_i32_0 = arith.constant 0 : i32
    %c0_i32_1 = arith.constant 0 : i32
    return %arg0, %c0_i32, %c0_i32_0 : i32, i32, i32
  }
  func.func @transform_1(%arg0: i32) -> (i32, i32) {
    %c0_i32 = arith.constant 0 : i32
    %c0_i32_0 = arith.constant 0 : i32
    %c0_i32_1 = arith.constant 0 : i32
    return %c0_i32, %c0_i32_0 : i32, i32
  }
  func.func @transform_2(%arg0: i32) -> (i32, i32) {
    %c0_i32 = arith.constant 0 : i32
    %c0_i32_0 = arith.constant 0 : i32
    %c0_i32_1 = arith.constant 0 : i32
    return %c0_i32, %c0_i32_0 : i32, i32
  }
  func.func @transform_3(%arg0: i32) -> (i32, i32) {
    %c0_i32 = arith.constant 0 : i32
    %c0_i32_0 = arith.constant 0 : i32
    %c0_i32_1 = arith.constant 0 : i32
    return %c0_i32, %c0_i32_0 : i32, i32
  }
  func.func @transform_4(%arg0: i32) -> (i32, i32) {
    %c0_i32 = arith.constant 0 : i32
    %c0_i32_0 = arith.constant 0 : i32
    %c0_i32_1 = arith.constant 0 : i32
    return %c0_i32, %c0_i32_0 : i32, i32
  }
  func.func @transform_5(%arg0: i32) -> (i32, i32) {
    %c0_i32 = arith.constant 0 : i32
    %c0_i32_0 = arith.constant 0 : i32
    %c0_i32_1 = arith.constant 0 : i32
    return %c0_i32, %c0_i32_0 : i32, i32
  }
  func.func @transform_6(%arg0: i32) -> (i32, i32) {
    %c0_i32 = arith.constant 0 : i32
    %c0_i32_0 = arith.constant 0 : i32
    %c0_i32_1 = arith.constant 0 : i32
    return %c0_i32, %c0_i32_0 : i32, i32
  }
  func.func @transform_7(%arg0: i32) -> (i32, i32, i32) {
    %c0_i32 = arith.constant 0 : i32
    %c0_i32_0 = arith.constant 0 : i32
    %c0_i32_1 = arith.constant 0 : i32
    return %arg0, %c0_i32, %c0_i32_0 : i32, i32, i32
  }
}

</mosaic_0001>

<llo_original>
// kernel: ibr_dilated_forward.1
$region0: #{ibr_dilated_forward.1}
  #allocation0 [shape = 'u32[]', space=smem, size = 0x4, offset = 0x4, fixed_abs, tag = 'smem constant byte address 0x4 - core index']
  #allocation1 [shape = 'u32[144,128]{1,0:T(1,128)}', space=vmem, size = 0x12000, scoped, tag = 'internal scratch']
  #allocation2 [shape = 'f32[5,512]{1,0:T(8,128)}', space=vmem, size = 0x4000, scoped, tag = 'scratch operand']
  %s0 = inlined_call_operand.vmem [shape: f32[2,4,256], index: 0, kind: input, shape index: {}]
  %s1 = inlined_call_operand.vmem [shape: f32[8,5], index: 1, kind: input, shape index: {}]
  %s2 = inlined_call_operand.vmem [shape: f32[8,5], index: 2, kind: input, shape index: {}]
  %s3 = inlined_call_operand.vmem [shape: f32[9,8], index: 3, kind: input, shape index: {}]
  %s4 = inlined_call_operand.vmem [shape: f32[9,256], index: 4, kind: input, shape index: {}]
  %s5 = inlined_call_operand.vmem [shape: f32[8,1], index: 5, kind: input, shape index: {}]
  %s6 = inlined_call_operand.vmem [shape: f32[8,1], index: 6, kind: input, shape index: {}]
  %s7 = inlined_call_operand.vmem [shape: f32[2,8,256], index: 7, kind: output, shape index: {}]
  %s8 = sld [smem:[#allocation0]]
  $region38: #{ibr_dilated_forward.1} parent=0
    _
  %s10 = ssub.s32 1, %s8
  %s11 = scalar_select 0, %s10, %s8
  // Predicated region
  $region2: #{ibr_dilated_forward.1} parent=0 // pred_check
    _
  $region3: #{ibr_dilated_forward.1} parent=0 // pred_check_branch
    %13 = sbr.rel (0) target = $region5
  $region4: #{ibr_dilated_forward.1} parent=0 // pred_region
    _
  $region5: #{ibr_dilated_forward.1} parent=0 // pred_fallthru
    _
  // Predicated region
  $region6: #{ibr_dilated_forward.1} parent=0 // pred_check
    _
  $region7: #{ibr_dilated_forward.1} parent=0 // pred_check_branch
    %15 = sbr.rel (0) target = $region9
  $region8: #{ibr_dilated_forward.1} parent=0 // pred_region
    _
  $region9: #{ibr_dilated_forward.1} parent=0 // pred_fallthru
    _
  // Predicated region
  $region10: #{ibr_dilated_forward.1} parent=0 // pred_check
    _
  $region11: #{ibr_dilated_forward.1} parent=0 // pred_check_branch
    %17 = sbr.rel (0) target = $region13
  $region12: #{ibr_dilated_forward.1} parent=0 // pred_region
    _
  $region13: #{ibr_dilated_forward.1} parent=0 // pred_fallthru
    _
  // Predicated region
  $region14: #{ibr_dilated_forward.1} parent=0 // pred_check
    _
  $region15: #{ibr_dilated_forward.1} parent=0 // pred_check_branch
    %19 = sbr.rel (0) target = $region17
  $region16: #{ibr_dilated_forward.1} parent=0 // pred_region
    _
  $region17: #{ibr_dilated_forward.1} parent=0 // pred_fallthru
    _
  // Predicated region
  $region18: #{ibr_dilated_forward.1} parent=0 // pred_check
    _
  $region19: #{ibr_dilated_forward.1} parent=0 // pred_check_branch
    %21 = sbr.rel (0) target = $region21
  $region20: #{ibr_dilated_forward.1} parent=0 // pred_region
    _
  $region21: #{ibr_dilated_forward.1} parent=0 // pred_fallthru
    _
  // Predicated region
  $region22: #{ibr_dilated_forward.1} parent=0 // pred_check
    _
  $region23: #{ibr_dilated_forward.1} parent=0 // pred_check_branch
    %23 = sbr.rel (0) target = $region25
  $region24: #{ibr_dilated_forward.1} parent=0 // pred_region
    _
  $region25: #{ibr_dilated_forward.1} parent=0 // pred_fallthru
    _
  // Predicated region
  $region26: #{ibr_dilated_forward.1} parent=0 // pred_check
    _
  $region27: #{ibr_dilated_forward.1} parent=0 // pred_check_branch
    %25 = sbr.rel (0) target = $region29
  $region28: #{ibr_dilated_forward.1} parent=0 // pred_region
    _
  $region29: #{ibr_dilated_forward.1} parent=0 // pred_fallthru
    _
  %26 = vst [vmem:[#allocation2] sm:$0x1f] 0.0
  %27 = vst [vmem:[#allocation2 + $0x18] sm:$0x1f] 0.0
  %v28 = vlaneseq
  %vm29 = vcmp.ge.s32.totalorder %v28, 0
  %vm30 = vcmp.lt.s32.totalorder %v28, 256
  %vm31 = vmand %vm29, %vm30
  %s32 = scalar_lea.vmem [#allocation2], 12
  %33 = vst.msk [vmem:[%s32] ss:$8 sm:$0x3] %vm31, 1.0
  %34 = vst.msk [vmem:[%s32] ss:$8 sm:$0x0] %vm31, 1.0
  %v35 = vld [vmem:[%s1] sm:$0xff]
  %v36 = vld [vmem:[%s2] sm:$0xff]
  %v37 = vld [vmem:[%s3] sm:$0xff]
  %v38 = vld [vmem:[%s3 + $0x8] sm:$0x1]
  %v39 = vld [vmem:[%s4] sm:$0xff]
  %v40 = vld [vmem:[%s4 + $0x8] sm:$0xff]
  %v41 = vld [vmem:[%s4 + $0x10] sm:$0x1]
  %v42 = vld [vmem:[%s4 + $0x18] sm:$0x1]
  %v43 = vld [vmem:[%s5] sm:$0xff]
  %v44 = vld [vmem:[%s6] sm:$0xff]
  %v45 = vld [vmem:[%s0] sm:$0xff]
  %v47 = vcombine.high %v45, %v45
  %49 = vst [vmem:[#allocation2 + $0x8] sm:$0xf] %v45
  %50 = vst [vmem:[#allocation2 + $0x10] sm:$0xf] %v47
  %v51 = vld [vmem:[#allocation2 + $0x8] sm:$0x1f]
  %v52 = vld [vmem:[#allocation2 + $0x10] sm:$0x1f]
  %vm53 = vcmask 39936
  %v55 = vsel %vm53, %v35, 0
  %vm57 = vcmask 1044480
  %v59 = vsel %vm57, %v51, 0
  %v62 = vsel %vm57, %v52, 0
  %64 = vmatprep.subr.mxu0 0.0
  %65 = vmatpush1.msra.mxu0 0.0
  %66 = vmatprep.subr.mxu0 0.0
  %67 = vmatpush1.msra.mxu0 0.0
  %68 = vmatprep.subr.mxu0 0.0
  %69 = vmatpush1.msra.mxu0 0.0
  %70 = vmatprep.subr.mxu0 0.0
  %71 = vmatpush1.msra.mxu0 0.0
  %72 = vmatprep.subr.mxu0 0.0
  %73 = vmatpush1.msra.mxu0 0.0
  %74 = vmatprep.subr.mxu0 0.0
  %75 = vmatpush1.msra.mxu0 0.0
  %76 = vmatprep.subr.mxu0 0.0
  %77 = vmatpush1.msra.mxu0 0.0
  %78 = vmatprep.subr.mxu0 0.0
  %79 = vmatpush1.msra.mxu0 0.0
  %80 = vmatprep.subr.mxu0 0.0
  %81 = vmatpush1.msra.mxu0 0.0
  %82 = vmatprep.subr.mxu0 0.0
  %83 = vmatpush1.msra.mxu0 0.0
  %84 = vmatprep.subr.mxu0 0.0
  %85 = vmatpush1.msra.mxu0 0.0
  %86 = vmatprep.subr.mxu0 0.0
  %87 = vmatpush1.msra.mxu0 0.0
  %88 = vmatprep.subr.mxu0 0.0
  %89 = vmatpush1.msra.mxu0 0.0
  %90 = vmatprep.subr.mxu0 0.0
  %91 = vmatpush1.msra.mxu0 0.0
  %92 = vmatprep.subr.mxu0 0.0
  %93 = vmatpush1.msra.mxu0 0.0
  %94 = vmatprep.subr.mxu0 %v62
  %95 = vmatpush1.msra.mxu0 %v59
  %96 = vmatprep.subr.mxu0 0.0
  %97 = vmatpush2.msra.mxu0 0.0
  %98 = vmatprep.subr.mxu0 0.0
  %99 = vmatpush2.msra.mxu0 0.0
  %100 = vmatprep.subr.mxu0 0.0
  %101 = vmatpush2.msra.mxu0 0.0
  %102 = vmatprep.subr.mxu0 0.0
  %103 = vmatpush2.msra.mxu0 0.0
  %104 = vmatprep.subr.mxu0 0.0
  %105 = vmatpush2.msra.mxu0 0.0
  %106 = vmatprep.subr.mxu0 0.0
  %107 = vmatpush2.msra.mxu0 0.0
  %108 = vmatprep.subr.mxu0 0.0
  %109 = vmatpush2.msra.mxu0 0.0
  %110 = vmatprep.subr.mxu0 0.0
  %111 = vmatpush2.msra.mxu0 0.0
  %112 = vmatprep.subr.mxu0 0.0
  %113 = vmatpush2.msra.mxu0 0.0
  %114 = vmatprep.subr.mxu0 0.0
  %115 = vmatpush2.msra.mxu0 0.0
  %116 = vmatprep.subr.mxu0 0.0
  %117 = vmatpush2.msra.mxu0 0.0
  %118 = vmatprep.subr.mxu0 0.0
  %119 = vmatpush2.msra.mxu0 0.0
  %120 = vmatprep.subr.mxu0 0.0
  %121 = vmatpush2.msra.mxu0 0.0
  %122 = vmatprep.subr.mxu0 0.0
  %123 = vmatpush2.msra.mxu0 0.0
  %124 = vmatprep.subr.mxu0 0.0
  %125 = vmatpush2.msra.mxu0 0.0
  %126 = vmatprep.subr.mxu0 0.0
  %127 = vmatpush2.msra.mxu0 0.0
  %128 = vmatprep.mubr.f32.mxu0 0.0
  %129 = vmatmul.mubr.f32.gmra.mxu0 %v55
  %v130 = vpop.f32.mrf.mxu0
  %v131 = vadd.f32 0.0, %v130
  %v132 = vpop.f32.mrf.mxu0
  %v133 = vadd.f32 0.0, %v132
  %134 = vdwg.mxu0
  %v135 = vmax.f32 %v131, 0.0
  %v136 = vmax.f32 %v133, 0.0
  %vm137 = vcmask 64512
  %v139 = vsel %vm137, %v37, 0
  %v142 = vsel %vm137, %v38, 0
  %144 = vmatprep.subr.mxu0 0.0
  %145 = vmatpush1.msra.mxu0 0.0
  %146 = vmatprep.subr.mxu0 0.0
  %147 = vmatpush1.msra.mxu0 0.0
  %148 = vmatprep.subr.mxu0 0.0
  %149 = vmatpush1.msra.mxu0 0.0
  %150 = vmatprep.subr.mxu0 0.0
  %151 = vmatpush1.msra.mxu0 0.0
  %152 = vmatprep.subr.mxu0 0.0
  %153 = vmatpush1.msra.mxu0 0.0
  %154 = vmatprep.subr.mxu0 0.0
  %155 = vmatpush1.msra.mxu0 0.0
  %156 = vmatprep.subr.mxu0 0.0
  %157 = vmatpush1.msra.mxu0 0.0
  %158 = vmatprep.subr.mxu0 0.0
  %159 = vmatpush1.msra.mxu0 0.0
  %160 = vmatprep.subr.mxu0 0.0
  %161 = vmatpush1.msra.mxu0 0.0
  %162 = vmatprep.subr.mxu0 0.0
  %163 = vmatpush1.msra.mxu0 0.0
  %164 = vmatprep.subr.mxu0 0.0
  %165 = vmatpush1.msra.mxu0 0.0
  %166 = vmatprep.subr.mxu0 0.0
  %167 = vmatpush1.msra.mxu0 0.0
  %168 = vmatprep.subr.mxu0 0.0
  %169 = vmatpush1.msra.mxu0 0.0
  %170 = vmatprep.subr.mxu0 0.0
  %171 = vmatpush1.msra.mxu0 0.0
  %172 = vmatprep.subr.mxu0 0.0
  %173 = vmatpush1.msra.mxu0 0.0
  %174 = vmatprep.subr.mxu0 %v136
  %175 = vmatpush1.msra.mxu0 %v135
  %176 = vmatprep.subr.mxu0 0.0
  %177 = vmatpush2.msra.mxu0 0.0
  %178 = vmatprep.subr.mxu0 0.0
  %179 = vmatpush2.msra.mxu0 0.0
  %180 = vmatprep.subr.mxu0 0.0
  %181 = vmatpush2.msra.mxu0 0.0
  %182 = vmatprep.subr.mxu0 0.0
  %183 = vmatpush2.msra.mxu0 0.0
  %184 = vmatprep.subr.mxu0 0.0
  %185 = vmatpush2.msra.mxu0 0.0
  %186 = vmatprep.subr.mxu0 0.0
  %187 = vmatpush2.msra.mxu0 0.0
  %188 = vmatprep.subr.mxu0 0.0
  %189 = vmatpush2.msra.mxu0 0.0
  %190 = vmatprep.subr.mxu0 0.0
  %191 = vmatpush2.msra.mxu0 0.0
  %192 = vmatprep.subr.mxu0 0.0
  %193 = vmatpush2.msra.mxu0 0.0
  %194 = vmatprep.subr.mxu0 0.0
  %195 = vmatpush2.msra.mxu0 0.0
  %196 = vmatprep.subr.mxu0 0.0
  %197 = vmatpush2.msra.mxu0 0.0
  %198 = vmatprep.subr.mxu0 0.0
  %199 = vmatpush2.msra.mxu0 0.0
  %200 = vmatprep.subr.mxu0 0.0
  %201 = vmatpush2.msra.mxu0 0.0
  %202 = vmatprep.subr.mxu0 0.0
  %203 = vmatpush2.msra.mxu0 0.0
  %204 = vmatprep.subr.mxu0 0.0
  %205 = vmatpush2.msra.mxu0 0.0
  %206 = vmatprep.subr.mxu0 0.0
  %207 = vmatpush2.msra.mxu0 0.0
  %208 = vmatprep.mubr.f32.mxu0 0.0
  %209 = vmatmul.mubr.f32.gmra.mxu0 %v139
  %v210 = vpop.f32.mrf.mxu0
  %v211 = vadd.f32 0.0, %v210
  %v212 = vpop.f32.mrf.mxu0
  %v213 = vadd.f32 0.0, %v212
  %214 = vmatprep.mubr.f32.mxu0 0.0
  %215 = vmatmul.mubr.f32.gmra.mxu0 %v142
  %v216 = vpop.f32.mrf.mxu0
  %v217 = vadd.f32 0.0, %v216
  %v218 = vpop.f32.mrf.mxu0
  %v219 = vadd.f32 0.0, %v218
  %220 = vdwg.mxu0
  %v221 = vmul.f32 %v211, %v39
  %v222 = vmul.f32 %v213, %v40
  %v223 = vmul.f32 %v217, %v41
  %v224 = vmul.f32 %v219, %v42
  %v225 = vlaneseq
  %v226 = vshrl.u32 %v225, 7
  %v227 = vsub.s32 4, %v226
  %v228 = vrot.slane %v221, %v227
  %v229 = vlaneseq
  %v230 = vshrl.u32 %v229, 7
  %v231 = vsub.s32 4, %v230
  %v232 = vrot.slane %v222, %v231
  %v233 = vmul.f32 %v228, %v51
  %v234 = vmul.f32 %v232, %v52
  %v235 = vld [vmem:[#allocation2] sm:$0x1f]
  %v236 = vlaneseq
  %v237 = vshrl.u32 %v236, 7
  %v238 = vsub.s32 0, %v237
  %v239 = vrot.slane %v221, %v238
  %v240 = vlaneseq
  %v241 = vshrl.u32 %v240, 7
  %v242 = vsub.s32 0, %v241
  %v243 = vrot.slane %v222, %v242
  %245 = vrot.lane.b32.xlu0 %v235, 34
  %v246 = vpop.permute.xlu0 %245
  %247 = vrot.lane.b32.xlu0 %v51, 34
  %v248 = vpop.permute.xlu0 %247
  %249 = vrot.lane.b32.xlu0 %v52, 34
  %v250 = vpop.permute.xlu0 %249
  %vm251 = vcmask 277504
  %v252 = vsel %vm251, %v246, %v248
  %v253 = vsel %vm251, %v248, %v250
  %v256 = vmul.f32 %v239, %v252
  %v257 = vmul.f32 %v243, %v253
  %v258 = vadd.f32 %v233, %v256
  %v259 = vadd.f32 %v234, %v257
  %v260 = vlaneseq
  %v261 = vshrl.u32 %v260, 7
  %v262 = vsub.s32 1, %v261
  %v263 = vrot.slane %v221, %v262
  %v264 = vlaneseq
  %v265 = vshrl.u32 %v264, 7
  %v266 = vsub.s32 1, %v265
  %v267 = vrot.slane %v222, %v266
  %268 = vrot.lane.b32.xlu0 %v235, 32
  %v269 = vpop.permute.xlu0 %268
  %270 = vrot.lane.b32.xlu0 %v51, 32
  %v271 = vpop.permute.xlu0 %270
  %272 = vrot.lane.b32.xlu0 %v52, 32
  %v273 = vpop.permute.xlu0 %272
  %vm274 = vcmask 261120
  %v275 = vsel %vm274, %v269, %v271
  %v276 = vsel %vm274, %v271, %v273
  %v279 = vmul.f32 %v263, %v275
  %v280 = vmul.f32 %v267, %v276
  %v281 = vadd.f32 %v258, %v279
  %v282 = vadd.f32 %v259, %v280
  %v283 = vlaneseq
  %v284 = vshrl.u32 %v283, 7
  %v285 = vsub.s32 2, %v284
  %v286 = vrot.slane %v221, %v285
  %v287 = vlaneseq
  %v288 = vshrl.u32 %v287, 7
  %v289 = vsub.s32 2, %v288
  %v290 = vrot.slane %v222, %v289
  %291 = vrot.lane.b32.xlu0 %v235, 30
  %v292 = vpop.permute.xlu0 %291
  %293 = vrot.lane.b32.xlu0 %v51, 30
  %v294 = vpop.permute.xlu0 %293
  %295 = vrot.lane.b32.xlu0 %v52, 30
  %v296 = vpop.permute.xlu0 %295
  %vm297 = vcmask 244736
  %v298 = vsel %vm297, %v292, %v294
  %v299 = vsel %vm297, %v294, %v296
  %v302 = vmul.f32 %v286, %v298
  %v303 = vmul.f32 %v290, %v299
  %v304 = vadd.f32 %v281, %v302
  %v305 = vadd.f32 %v282, %v303
  %v306 = vlaneseq
  %v307 = vshrl.u32 %v306, 7
  %v308 = vsub.s32 3, %v307
  %v309 = vrot.slane %v221, %v308
  %v310 = vlaneseq
  %v311 = vshrl.u32 %v310, 7
  %v312 = vsub.s32 3, %v311
  %v313 = vrot.slane %v222, %v312
  %314 = vrot.lane.b32.xlu0 %v235, 2
  %v315 = vpop.permute.xlu0 %314
  %316 = vrot.lane.b32.xlu0 %v51, 2
  %v317 = vpop.permute.xlu0 %316
  %318 = vrot.lane.b32.xlu0 %v52, 2
  %v319 = vpop.permute.xlu0 %318
  %vm320 = vcmask 15360
  %v321 = vsel %vm320, %v315, %v317
  %v322 = vsel %vm320, %v317, %v319
  %v325 = vmul.f32 %v309, %v321
  %v326 = vmul.f32 %v313, %v322
  %v327 = vadd.f32 %v304, %v325
  %v328 = vadd.f32 %v305, %v326
  %v329 = vld [vmem:[#allocation2 + $0x8] sm:$0x1f]
  %v330 = vld [vmem:[#allocation2 + $0x10] sm:$0x1f]
  %v331 = vld [vmem:[#allocation2 + $0x18] sm:$0x1f]
  %v332 = vlaneseq
  %v333 = vshrl.u32 %v332, 7
  %v334 = vsub.s32 5, %v333
  %v335 = vrot.slane %v221, %v334
  %v336 = vlaneseq
  %v337 = vshrl.u32 %v336, 7
  %v338 = vsub.s32 5, %v337
  %v339 = vrot.slane %v222, %v338
  %343 = vrot.lane.b32.xlu0 %v329, 126
  %v344 = vpop.permute.xlu0 %343
  %345 = vrot.lane.b32.xlu0 %v330, 126
  %v346 = vpop.permute.xlu0 %345
  %347 = vrot.lane.b32.xlu0 %v331, 126
  %v348 = vpop.permute.xlu0 %347
  %vm349 = vcmask 1031168
  %v350 = vsel %vm349, %v344, %v346
  %v351 = vsel %vm349, %v346, %v348
  %v354 = vmul.f32 %v335, %v350
  %v355 = vmul.f32 %v339, %v351
  %v356 = vadd.f32 %v327, %v354
  %v357 = vadd.f32 %v328, %v355
  %v358 = vlaneseq
  %v359 = vshrl.u32 %v358, 7
  %v360 = vsub.s32 6, %v359
  %v361 = vrot.slane %v221, %v360
  %v362 = vlaneseq
  %v363 = vshrl.u32 %v362, 7
  %v364 = vsub.s32 6, %v363
  %v365 = vrot.slane %v222, %v364
  %366 = vrot.lane.b32.xlu0 %v329, 98
  %v367 = vpop.permute.xlu0 %366
  %368 = vrot.lane.b32.xlu0 %v330, 98
  %v369 = vpop.permute.xlu0 %368
  %370 = vrot.lane.b32.xlu0 %v331, 98
  %v371 = vpop.permute.xlu0 %370
  %vm372 = vcmask 801792
  %v373 = vsel %vm372, %v367, %v369
  %v374 = vsel %vm372, %v369, %v371
  %v377 = vmul.f32 %v361, %v373
  %v378 = vmul.f32 %v365, %v374
  %v379 = vadd.f32 %v356, %v377
  %v380 = vadd.f32 %v357, %v378
  %v381 = vlaneseq
  %v382 = vshrl.u32 %v381, 7
  %v383 = vsub.s32 7, %v382
  %v384 = vrot.slane %v221, %v383
  %v385 = vlaneseq
  %v386 = vshrl.u32 %v385, 7
  %v387 = vsub.s32 7, %v386
  %v388 = vrot.slane %v222, %v387
  %389 = vrot.lane.b32.xlu0 %v329, 96
  %v390 = vpop.permute.xlu0 %389
  %391 = vrot.lane.b32.xlu0 %v330, 96
  %v392 = vpop.permute.xlu0 %391
  %393 = vrot.lane.b32.xlu0 %v331, 96
  %v394 = vpop.permute.xlu0 %393
  %vm395 = vcmask 785408
  %v396 = vsel %vm395, %v390, %v392
  %v397 = vsel %vm395, %v392, %v394
  %v400 = vmul.f32 %v384, %v396
  %v401 = vmul.f32 %v388, %v397
  %v402 = vadd.f32 %v379, %v400
  %v403 = vadd.f32 %v380, %v401
  %v404 = vlaneseq
  %v405 = vshrl.u32 %v404, 7
  %v406 = vsub.s32 0, %v405
  %v407 = vrot.slane %v223, %v406
  %v408 = vlaneseq
  %v409 = vshrl.u32 %v408, 7
  %v410 = vsub.s32 0, %v409
  %v411 = vrot.slane %v224, %v410
  %412 = vrot.lane.b32.xlu0 %v329, 94
  %v413 = vpop.permute.xlu0 %412
  %414 = vrot.lane.b32.xlu0 %v330, 94
  %v415 = vpop.permute.xlu0 %414
  %416 = vrot.lane.b32.xlu0 %v331, 94
  %v417 = vpop.permute.xlu0 %416
  %vm418 = vcmask 769024
  %v419 = vsel %vm418, %v413, %v415
  %v420 = vsel %vm418, %v415, %v417
  %v423 = vmul.f32 %v407, %v419
  %v424 = vmul.f32 %v411, %v420
  %v425 = vadd.f32 %v402, %v423
  %v426 = vadd.f32 %v403, %v424
  %428 = vset.pattern.permute.xlu0 0
  %429 = vperm.xlu0 %428, %v43
  %v430 = vpop.permute.xlu0 %429
  %v433 = vsel %vm53, %v36, 0
  %v436 = vsel %vm57, %v425, 0
  %v439 = vsel %vm57, %v426, 0
  %441 = vmatprep.subr.mxu0 0.0
  %442 = vmatpush1.msra.mxu0 0.0
  %443 = vmatprep.subr.mxu0 0.0
  %444 = vmatpush1.msra.mxu0 0.0
  %445 = vmatprep.subr.mxu0 0.0
  %446 = vmatpush1.msra.mxu0 0.0
  %447 = vmatprep.subr.mxu0 0.0
  %448 = vmatpush1.msra.mxu0 0.0
  %449 = vmatprep.subr.mxu0 0.0
  %450 = vmatpush1.msra.mxu0 0.0
  %451 = vmatprep.subr.mxu0 0.0
  %452 = vmatpush1.msra.mxu0 0.0
  %453 = vmatprep.subr.mxu0 0.0
  %454 = vmatpush1.msra.mxu0 0.0
  %455 = vmatprep.subr.mxu0 0.0
  %456 = vmatpush1.msra.mxu0 0.0
  %457 = vmatprep.subr.mxu0 0.0
  %458 = vmatpush1.msra.mxu0 0.0
  %459 = vmatprep.subr.mxu0 0.0
  %460 = vmatpush1.msra.mxu0 0.0
  %461 = vmatprep.subr.mxu0 0.0
  %462 = vmatpush1.msra.mxu0 0.0
  %463 = vmatprep.subr.mxu0 0.0
  %464 = vmatpush1.msra.mxu0 0.0
  %465 = vmatprep.subr.mxu0 0.0
  %466 = vmatpush1.msra.mxu0 0.0
  %467 = vmatprep.subr.mxu0 0.0
  %468 = vmatpush1.msra.mxu0 0.0
  %469 = vmatprep.subr.mxu0 0.0
  %470 = vmatpush1.msra.mxu0 0.0
  %471 = vmatprep.subr.mxu0 %v439
  %472 = vmatpush1.msra.mxu0 %v436
  %473 = vmatprep.subr.mxu0 0.0
  %474 = vmatpush2.msra.mxu0 0.0
  %475 = vmatprep.subr.mxu0 0.0
  %476 = vmatpush2.msra.mxu0 0.0
  %477 = vmatprep.subr.mxu0 0.0
  %478 = vmatpush2.msra.mxu0 0.0
  %479 = vmatprep.subr.mxu0 0.0
  %480 = vmatpush2.msra.mxu0 0.0
  %481 = vmatprep.subr.mxu0 0.0
  %482 = vmatpush2.msra.mxu0 0.0
  %483 = vmatprep.subr.mxu0 0.0
  %484 = vmatpush2.msra.mxu0 0.0
  %485 = vmatprep.subr.mxu0 0.0
  %486 = vmatpush2.msra.mxu0 0.0
  %487 = vmatprep.subr.mxu0 0.0
  %488 = vmatpush2.msra.mxu0 0.0
  %489 = vmatprep.subr.mxu0 0.0
  %490 = vmatpush2.msra.mxu0 0.0
  %491 = vmatprep.subr.mxu0 0.0
  %492 = vmatpush2.msra.mxu0 0.0
  %493 = vmatprep.subr.mxu0 0.0
  %494 = vmatpush2.msra.mxu0 0.0
  %495 = vmatprep.subr.mxu0 0.0
  %496 = vmatpush2.msra.mxu0 0.0
  %497 = vmatprep.subr.mxu0 0.0
  %498 = vmatpush2.msra.mxu0 0.0
  %499 = vmatprep.subr.mxu0 0.0
  %500 = vmatpush2.msra.mxu0 0.0
  %501 = vmatprep.subr.mxu0 0.0
  %502 = vmatpush2.msra.mxu0 0.0
  %503 = vmatprep.subr.mxu0 0.0
  %504 = vmatpush2.msra.mxu0 0.0
  %505 = vmatprep.mubr.f32.mxu0 0.0
  %506 = vmatmul.mubr.f32.gmra.mxu0 %v433
  %v507 = vpop.f32.mrf.mxu0
  %v508 = vadd.f32 %v430, %v507
  %v509 = vpop.f32.mrf.mxu0
  %v510 = vadd.f32 %v430, %v509
  %511 = vdwg.mxu0
  %vm512 = vcmp.ge.f32.partialorder %v508, 0.0
  %vm513 = vcmp.ge.f32.partialorder %v510, 0.0
  %515 = vset.pattern.permute.xlu0 0
  %516 = vperm.xlu0 %515, %v44
  %v517 = vpop.permute.xlu0 %516
  %v519 = vmul.f32 %v517, %v508
  %v520 = vmul.f32 %v517, %v510
  %v521 = vsel %vm512, %v508, %v519
  %v522 = vsel %vm513, %v510, %v520
  %523 = vst [vmem:[%s7] sm:$0xff] %v521
  %524 = vst [vmem:[%s7 + $0x8] sm:$0xff] %v522
  %s525 = scalar_lea.vmem %s0, 8
  %v526 = vld [vmem:[%s525] sm:$0xff]
  %v528 = vcombine.high %v526, %v526
  %530 = vst [vmem:[#allocation2 + $0x8] sm:$0xf] %v526
  %531 = vst [vmem:[#allocation2 + $0x10] sm:$0xf] %v528
  %v532 = vld [vmem:[#allocation2 + $0x8] sm:$0x1f]
  %v533 = vld [vmem:[#allocation2 + $0x10] sm:$0x1f]
  %v535 = vsel %vm57, %v532, 0
  %v538 = vsel %vm57, %v533, 0
  %540 = vmatprep.subr.mxu0 0.0
  %541 = vmatpush1.msra.mxu0 0.0
  %542 = vmatprep.subr.mxu0 0.0
  %543 = vmatpush1.msra.mxu0 0.0
  %544 = vmatprep.subr.mxu0 0.0
  %545 = vmatpush1.msra.mxu0 0.0
  %546 = vmatprep.subr.mxu0 0.0
  %547 = vmatpush1.msra.mxu0 0.0
  %548 = vmatprep.subr.mxu0 0.0
  %549 = vmatpush1.msra.mxu0 0.0
  %550 = vmatprep.subr.mxu0 0.0
  %551 = vmatpush1.msra.mxu0 0.0
  %552 = vmatprep.subr.mxu0 0.0
  %553 = vmatpush1.msra.mxu0 0.0
  %554 = vmatprep.subr.mxu0 0.0
  %555 = vmatpush1.msra.mxu0 0.0
  %556 = vmatprep.subr.mxu0 0.0
  %557 = vmatpush1.msra.mxu0 0.0
  %558 = vmatprep.subr.mxu0 0.0
  %559 = vmatpush1.msra.mxu0 0.0
  %560 = vmatprep.subr.mxu0 0.0
  %561 = vmatpush1.msra.mxu0 0.0
  %562 = vmatprep.subr.mxu0 0.0
  %563 = vmatpush1.msra.mxu0 0.0
  %564 = vmatprep.subr.mxu0 0.0
  %565 = vmatpush1.msra.mxu0 0.0
  %566 = vmatprep.subr.mxu0 0.0
  %567 = vmatpush1.msra.mxu0 0.0
  %568 = vmatprep.subr.mxu0 0.0
  %569 = vmatpush1.msra.mxu0 0.0
  %570 = vmatprep.subr.mxu0 %v538
  %571 = vmatpush1.msra.mxu0 %v535
  %572 = vmatprep.subr.mxu0 0.0
  %573 = vmatpush2.msra.mxu0 0.0
  %574 = vmatprep.subr.mxu0 0.0
  %575 = vmatpush2.msra.mxu0 0.0
  %576 = vmatprep.subr.mxu0 0.0
  %577 = vmatpush2.msra.mxu0 0.0
  %578 = vmatprep.subr.mxu0 0.0
  %579 = vmatpush2.msra.mxu0 0.0
  %580 = vmatprep.subr.mxu0 0.0
  %581 = vmatpush2.msra.mxu0 0.0
  %582 = vmatprep.subr.mxu0 0.0
  %583 = vmatpush2.msra.mxu0 0.0
  %584 = vmatprep.subr.mxu0 0.0
  %585 = vmatpush2.msra.mxu0 0.0
  %586 = vmatprep.subr.mxu0 0.0
  %587 = vmatpush2.msra.mxu0 0.0
  %588 = vmatprep.subr.mxu0 0.0
  %589 = vmatpush2.msra.mxu0 0.0
  %590 = vmatprep.subr.mxu0 0.0
  %591 = vmatpush2.msra.mxu0 0.0
  %592 = vmatprep.subr.mxu0 0.0
  %593 = vmatpush2.msra.mxu0 0.0
  %594 = vmatprep.subr.mxu0 0.0
  %595 = vmatpush2.msra.mxu0 0.0
  %596 = vmatprep.subr.mxu0 0.0
  %597 = vmatpush2.msra.mxu0 0.0
  %598 = vmatprep.subr.mxu0 0.0
  %599 = vmatpush2.msra.mxu0 0.0
  %600 = vmatprep.subr.mxu0 0.0
  %601 = vmatpush2.msra.mxu0 0.0
  %602 = vmatprep.subr.mxu0 0.0
  %603 = vmatpush2.msra.mxu0 0.0
  %604 = vmatprep.mubr.f32.mxu0 0.0
  %605 = vmatmul.mubr.f32.gmra.mxu0 %v55
  %v606 = vpop.f32.mrf.mxu0
  %v607 = vadd.f32 0.0, %v606
  %v608 = vpop.f32.mrf.mxu0
  %v609 = vadd.f32 0.0, %v608
  %610 = vdwg.mxu0
  %v611 = vmax.f32 %v607, 0.0
  %v612 = vmax.f32 %v609, 0.0
  %613 = vmatprep.subr.mxu0 0.0
  %614 = vmatpush1.msra.mxu0 0.0
  %615 = vmatprep.subr.mxu0 0.0
  %616 = vmatpush1.msra.mxu0 0.0
  %617 = vmatprep.subr.mxu0 0.0
  %618 = vmatpush1.msra.mxu0 0.0
  %619 = vmatprep.subr.mxu0 0.0
  %620 = vmatpush1.msra.mxu0 0.0
  %621 = vmatprep.subr.mxu0 0.0
  %622 = vmatpush1.msra.mxu0 0.0
  %623 = vmatprep.subr.mxu0 0.0
  %624 = vmatpush1.msra.mxu0 0.0
  %625 = vmatprep.subr.mxu0 0.0
  %626 = vmatpush1.msra.mxu0 0.0
  %627 = vmatprep.subr.mxu0 0.0
  %628 = vmatpush1.msra.mxu0 0.0
  %629 = vmatprep.subr.mxu0 0.0
  %630 = vmatpush1.msra.mxu0 0.0
  %631 = vmatprep.subr.mxu0 0.0
  %632 = vmatpush1.msra.mxu0 0.0
  %633 = vmatprep.subr.mxu0 0.0
  %634 = vmatpush1.msra.mxu0 0.0
  %635 = vmatprep.subr.mxu0 0.0
  %636 = vmatpush1.msra.mxu0 0.0
  %637 = vmatprep.subr.mxu0 0.0
  %638 = vmatpush1.msra.mxu0 0.0
  %639 = vmatprep.subr.mxu0 0.0
  %640 = vmatpush1.msra.mxu0 0.0
  %641 = vmatprep.subr.mxu0 0.0
  %642 = vmatpush1.msra.mxu0 0.0
  %643 = vmatprep.subr.mxu0 %v612
  %644 = vmatpush1.msra.mxu0 %v611
  %645 = vmatprep.subr.mxu0 0.0
  %646 = vmatpush2.msra.mxu0 0.0
  %647 = vmatprep.subr.mxu0 0.0
  %648 = vmatpush2.msra.mxu0 0.0
  %649 = vmatprep.subr.mxu0 0.0
  %650 = vmatpush2.msra.mxu0 0.0
  %651 = vmatprep.subr.mxu0 0.0
  %652 = vmatpush2.msra.mxu0 0.0
  %653 = vmatprep.subr.mxu0 0.0
  %654 = vmatpush2.msra.mxu0 0.0
  %655 = vmatprep.subr.mxu0 0.0
  %656 = vmatpush2.msra.mxu0 0.0
  %657 = vmatprep.subr.mxu0 0.0
  %658 = vmatpush2.msra.mxu0 0.0
  %659 = vmatprep.subr.mxu0 0.0
  %660 = vmatpush2.msra.mxu0 0.0
  %661 = vmatprep.subr.mxu0 0.0
  %662 = vmatpush2.msra.mxu0 0.0
  %663 = vmatprep.subr.mxu0 0.0
  %664 = vmatpush2.msra.mxu0 0.0
  %665 = vmatprep.subr.mxu0 0.0
  %666 = vmatpush2.msra.mxu0 0.0
  %667 = vmatprep.subr.mxu0 0.0
  %668 = vmatpush2.msra.mxu0 0.0
  %669 = vmatprep.subr.mxu0 0.0
  %670 = vmatpush2.msra.mxu0 0.0
  %671 = vmatprep.subr.mxu0 0.0
  %672 = vmatpush2.msra.mxu0 0.0
  %673 = vmatprep.subr.mxu0 0.0
  %674 = vmatpush2.msra.mxu0 0.0
  %675 = vmatprep.subr.mxu0 0.0
  %676 = vmatpush2.msra.mxu0 0.0
  %677 = vmatprep.mubr.f32.mxu0 0.0
  %678 = vmatmul.mubr.f32.gmra.mxu0 %v139
  %v679 = vpop.f32.mrf.mxu0
  %v680 = vadd.f32 0.0, %v679
  %v681 = vpop.f32.mrf.mxu0
  %v682 = vadd.f32 0.0, %v681
  %683 = vmatprep.mubr.f32.mxu0 0.0
  %684 = vmatmul.mubr.f32.gmra.mxu0 %v142
  %v685 = vpop.f32.mrf.mxu0
  %v686 = vadd.f32 0.0, %v685
  %v687 = vpop.f32.mrf.mxu0
  %v688 = vadd.f32 0.0, %v687
  %689 = vdwg.mxu0
  %v690 = vmul.f32 %v680, %v39
  %v691 = vmul.f32 %v682, %v40
  %v692 = vmul.f32 %v686, %v41
  %v693 = vmul.f32 %v688, %v42
  %v694 = vlaneseq
  %v695 = vshrl.u32 %v694, 7
  %v696 = vsub.s32 4, %v695
  %v697 = vrot.slane %v690, %v696
  %v698 = vlaneseq
  %v699 = vshrl.u32 %v698, 7
  %v700 = vsub.s32 4, %v699
  %v701 = vrot.slane %v691, %v700
  %v702 = vmul.f32 %v697, %v532
  %v703 = vmul.f32 %v701, %v533
  %v704 = vld [vmem:[#allocation2] sm:$0x1f]
  %v705 = vlaneseq
  %v706 = vshrl.u32 %v705, 7
  %v707 = vsub.s32 0, %v706
  %v708 = vrot.slane %v690, %v707
  %v709 = vlaneseq
  %v710 = vshrl.u32 %v709, 7
  %v711 = vsub.s32 0, %v710
  %v712 = vrot.slane %v691, %v711
  %714 = vrot.lane.b32.xlu0 %v704, 34
  %v715 = vpop.permute.xlu0 %714
  %716 = vrot.lane.b32.xlu0 %v532, 34
  %v717 = vpop.permute.xlu0 %716
  %718 = vrot.lane.b32.xlu0 %v533, 34
  %v719 = vpop.permute.xlu0 %718
  %v720 = vsel %vm251, %v715, %v717
  %v721 = vsel %vm251, %v717, %v719
  %v724 = vmul.f32 %v708, %v720
  %v725 = vmul.f32 %v712, %v721
  %v726 = vadd.f32 %v702, %v724
  %v727 = vadd.f32 %v703, %v725
  %v728 = vlaneseq
  %v729 = vshrl.u32 %v728, 7
  %v730 = vsub.s32 1, %v729
  %v731 = vrot.slane %v690, %v730
  %v732 = vlaneseq
  %v733 = vshrl.u32 %v732, 7
  %v734 = vsub.s32 1, %v733
  %v735 = vrot.slane %v691, %v734
  %736 = vrot.lane.b32.xlu0 %v704, 32
  %v737 = vpop.permute.xlu0 %736
  %738 = vrot.lane.b32.xlu0 %v532, 32
  %v739 = vpop.permute.xlu0 %738
  %740 = vrot.lane.b32.xlu0 %v533, 32
  %v741 = vpop.permute.xlu0 %740
  %v742 = vsel %vm274, %v737, %v739
  %v743 = vsel %vm274, %v739, %v741
  %v746 = vmul.f32 %v731, %v742
  %v747 = vmul.f32 %v735, %v743
  %v748 = vadd.f32 %v726, %v746
  %v749 = vadd.f32 %v727, %v747
  %v750 = vlaneseq
  %v751 = vshrl.u32 %v750, 7
  %v752 = vsub.s32 2, %v751
  %v753 = vrot.slane %v690, %v752
  %v754 = vlaneseq
  %v755 = vshrl.u32 %v754, 7
  %v756 = vsub.s32 2, %v755
  %v757 = vrot.slane %v691, %v756
  %758 = vrot.lane.b32.xlu0 %v704, 30
  %v759 = vpop.permute.xlu0 %758
  %760 = vrot.lane.b32.xlu0 %v532, 30
  %v761 = vpop.permute.xlu0 %760
  %762 = vrot.lane.b32.xlu0 %v533, 30
  %v763 = vpop.permute.xlu0 %762
  %v764 = vsel %vm297, %v759, %v761
  %v765 = vsel %vm297, %v761, %v763
  %v768 = vmul.f32 %v753, %v764
  %v769 = vmul.f32 %v757, %v765
  %v770 = vadd.f32 %v748, %v768
  %v771 = vadd.f32 %v749, %v769
  %v772 = vlaneseq
  %v773 = vshrl.u32 %v772, 7
  %v774 = vsub.s32 3, %v773
  %v775 = vrot.slane %v690, %v774
  %v776 = vlaneseq
  %v777 = vshrl.u32 %v776, 7
  %v778 = vsub.s32 3, %v777
  %v779 = vrot.slane %v691, %v778
  %780 = vrot.lane.b32.xlu0 %v704, 2
  %v781 = vpop.permute.xlu0 %780
  %782 = vrot.lane.b32.xlu0 %v532, 2
  %v783 = vpop.permute.xlu0 %782
  %784 = vrot.lane.b32.xlu0 %v533, 2
  %v785 = vpop.permute.xlu0 %784
  %v786 = vsel %vm320, %v781, %v783
  %v787 = vsel %vm320, %v783, %v785
  %v790 = vmul.f32 %v775, %v786
  %v791 = vmul.f32 %v779, %v787
  %v792 = vadd.f32 %v770, %v790
  %v793 = vadd.f32 %v771, %v791
  %v794 = vld [vmem:[#allocation2 + $0x8] sm:$0x1f]
  %v795 = vld [vmem:[#allocation2 + $0x10] sm:$0x1f]
  %v796 = vld [vmem:[#allocation2 + $0x18] sm:$0x1f]
  %v797 = vlaneseq
  %v798 = vshrl.u32 %v797, 7
  %v799 = vsub.s32 5, %v798
  %v800 = vrot.slane %v690, %v799
  %v801 = vlaneseq
  %v802 = vshrl.u32 %v801, 7
  %v803 = vsub.s32 5, %v802
  %v804 = vrot.slane %v691, %v803
  %808 = vrot.lane.b32.xlu0 %v794, 126
  %v809 = vpop.permute.xlu0 %808
  %810 = vrot.lane.b32.xlu0 %v795, 126
  %v811 = vpop.permute.xlu0 %810
  %812 = vrot.lane.b32.xlu0 %v796, 126
  %v813 = vpop.permute.xlu0 %812
  %v814 = vsel %vm349, %v809, %v811
  %v815 = vsel %vm349, %v811, %v813
  %v818 = vmul.f32 %v800, %v814
  %v819 = vmul.f32 %v804, %v815
  %v820 = vadd.f32 %v792, %v818
  %v821 = vadd.f32 %v793, %v819
  %v822 = vlaneseq
  %v823 = vshrl.u32 %v822, 7
  %v824 = vsub.s32 6, %v823
  %v825 = vrot.slane %v690, %v824
  %v826 = vlaneseq
  %v827 = vshrl.u32 %v826, 7
  %v828 = vsub.s32 6, %v827
  %v829 = vrot.slane %v691, %v828
  %830 = vrot.lane.b32.xlu0 %v794, 98
  %v831 = vpop.permute.xlu0 %830
  %832 = vrot.lane.b32.xlu0 %v795, 98
  %v833 = vpop.permute.xlu0 %832
  %834 = vrot.lane.b32.xlu0 %v796, 98
  %v835 = vpop.permute.xlu0 %834
  %v836 = vsel %vm372, %v831, %v833
  %v837 = vsel %vm372, %v833, %v835
  %v840 = vmul.f32 %v825, %v836
  %v841 = vmul.f32 %v829, %v837
  %v842 = vadd.f32 %v820, %v840
  %v843 = vadd.f32 %v821, %v841
  %v844 = vlaneseq
  %v845 = vshrl.u32 %v844, 7
  %v846 = vsub.s32 7, %v845
  %v847 = vrot.slane %v690, %v846
  %v848 = vlaneseq
  %v849 = vshrl.u32 %v848, 7
  %v850 = vsub.s32 7, %v849
  %v851 = vrot.slane %v691, %v850
  %852 = vrot.lane.b32.xlu0 %v794, 96
  %v853 = vpop.permute.xlu0 %852
  %854 = vrot.lane.b32.xlu0 %v795, 96
  %v855 = vpop.permute.xlu0 %854
  %856 = vrot.lane.b32.xlu0 %v796, 96
  %v857 = vpop.permute.xlu0 %856
  %v858 = vsel %vm395, %v853, %v855
  %v859 = vsel %vm395, %v855, %v857
  %v862 = vmul.f32 %v847, %v858
  %v863 = vmul.f32 %v851, %v859
  %v864 = vadd.f32 %v842, %v862
  %v865 = vadd.f32 %v843, %v863
  %v866 = vlaneseq
  %v867 = vshrl.u32 %v866, 7
  %v868 = vsub.s32 0, %v867
  %v869 = vrot.slane %v692, %v868
  %v870 = vlaneseq
  %v871 = vshrl.u32 %v870, 7
  %v872 = vsub.s32 0, %v871
  %v873 = vrot.slane %v693, %v872
  %874 = vrot.lane.b32.xlu0 %v794, 94
  %v875 = vpop.permute.xlu0 %874
  %876 = vrot.lane.b32.xlu0 %v795, 94
  %v877 = vpop.permute.xlu0 %876
  %878 = vrot.lane.b32.xlu0 %v796, 94
  %v879 = vpop.permute.xlu0 %878
  %v880 = vsel %vm418, %v875, %v877
  %v881 = vsel %vm418, %v877, %v879
  %v884 = vmul.f32 %v869, %v880
  %v885 = vmul.f32 %v873, %v881
  %v886 = vadd.f32 %v864, %v884
  %v887 = vadd.f32 %v865, %v885
  %v889 = vsel %vm57, %v886, 0
  %v892 = vsel %vm57, %v887, 0
  %894 = vmatprep.subr.mxu0 0.0
  %895 = vmatpush1.msra.mxu0 0.0
  %896 = vmatprep.subr.mxu0 0.0
  %897 = vmatpush1.msra.mxu0 0.0
  %898 = vmatprep.subr.mxu0 0.0
  %899 = vmatpush1.msra.mxu0 0.0
  %900 = vmatprep.subr.mxu0 0.0
  %901 = vmatpush1.msra.mxu0 0.0
  %902 = vmatprep.subr.mxu0 0.0
  %903 = vmatpush1.msra.mxu0 0.0
  %904 = vmatprep.subr.mxu0 0.0
  %905 = vmatpush1.msra.mxu0 0.0
  %906 = vmatprep.subr.mxu0 0.0
  %907 = vmatpush1.msra.mxu0 0.0
  %908 = vmatprep.subr.mxu0 0.0
  %909 = vmatpush1.msra.mxu0 0.0
  %910 = vmatprep.subr.mxu0 0.0
  %911 = vmatpush1.msra.mxu0 0.0
  %912 = vmatprep.subr.mxu0 0.0
  %913 = vmatpush1.msra.mxu0 0.0
  %914 = vmatprep.subr.mxu0 0.0
  %915 = vmatpush1.msra.mxu0 0.0
  %916 = vmatprep.subr.mxu0 0.0
  %917 = vmatpush1.msra.mxu0 0.0
  %918 = vmatprep.subr.mxu0 0.0
  %919 = vmatpush1.msra.mxu0 0.0
  %920 = vmatprep.subr.mxu0 0.0
  %921 = vmatpush1.msra.mxu0 0.0
  %922 = vmatprep.subr.mxu0 0.0
  %923 = vmatpush1.msra.mxu0 0.0
  %924 = vmatprep.subr.mxu0 %v892
  %925 = vmatpush1.msra.mxu0 %v889
  %926 = vmatprep.subr.mxu0 0.0
  %927 = vmatpush2.msra.mxu0 0.0
  %928 = vmatprep.subr.mxu0 0.0
  %929 = vmatpush2.msra.mxu0 0.0
  %930 = vmatprep.subr.mxu0 0.0
  %931 = vmatpush2.msra.mxu0 0.0
  %932 = vmatprep.subr.mxu0 0.0
  %933 = vmatpush2.msra.mxu0 0.0
  %934 = vmatprep.subr.mxu0 0.0
  %935 = vmatpush2.msra.mxu0 0.0
  %936 = vmatprep.subr.mxu0 0.0
  %937 = vmatpush2.msra.mxu0 0.0
  %938 = vmatprep.subr.mxu0 0.0
  %939 = vmatpush2.msra.mxu0 0.0
  %940 = vmatprep.subr.mxu0 0.0
  %941 = vmatpush2.msra.mxu0 0.0
  %942 = vmatprep.subr.mxu0 0.0
  %943 = vmatpush2.msra.mxu0 0.0
  %944 = vmatprep.subr.mxu0 0.0
  %945 = vmatpush2.msra.mxu0 0.0
  %946 = vmatprep.subr.mxu0 0.0
  %947 = vmatpush2.msra.mxu0 0.0
  %948 = vmatprep.subr.mxu0 0.0
  %949 = vmatpush2.msra.mxu0 0.0
  %950 = vmatprep.subr.mxu0 0.0
  %951 = vmatpush2.msra.mxu0 0.0
  %952 = vmatprep.subr.mxu0 0.0
  %953 = vmatpush2.msra.mxu0 0.0
  %954 = vmatprep.subr.mxu0 0.0
  %955 = vmatpush2.msra.mxu0 0.0
  %956 = vmatprep.subr.mxu0 0.0
  %957 = vmatpush2.msra.mxu0 0.0
  %958 = vmatprep.mubr.f32.mxu0 0.0
  %959 = vmatmul.mubr.f32.gmra.mxu0 %v433
  %v960 = vpop.f32.mrf.mxu0
  %v961 = vadd.f32 %v430, %v960
  %v962 = vpop.f32.mrf.mxu0
  %v963 = vadd.f32 %v430, %v962
  %964 = vdwg.mxu0
  %vm965 = vcmp.ge.f32.partialorder %v961, 0.0
  %vm966 = vcmp.ge.f32.partialorder %v963, 0.0
  %v967 = vmul.f32 %v517, %v961
  %v968 = vmul.f32 %v517, %v963
  %v969 = vsel %vm965, %v961, %v967
  %v970 = vsel %vm966, %v963, %v968
  %s971 = scalar_lea.vmem %s7, 16
  %972 = vst [vmem:[%s971] sm:$0xff] %v969
  %973 = vst [vmem:[%s971 + $0x8] sm:$0xff] %v970
  // Predicated region
  $region30: #{ibr_dilated_forward.1} parent=0 // pred_check
    _
  $region31: #{ibr_dilated_forward.1} parent=0 // pred_check_branch
    %975 = sbr.rel (0) target = $region33
  $region32: #{ibr_dilated_forward.1} parent=0 // pred_region
    _
  $region33: #{ibr_dilated_forward.1} parent=0 // pred_fallthru
    _
  // Predicated region
  $region34: #{ibr_dilated_forward.1} parent=0 // pred_check
    _
  $region35: #{ibr_dilated_forward.1} parent=0 // pred_check_branch
    %977 = sbr.rel (0) target = $region37
  $region36: #{ibr_dilated_forward.1} parent=0 // pred_region
    _
  $region37: #{ibr_dilated_forward.1} parent=0 // pred_fallthru
    _

</llo_original>
